<compile_context>
chip_gen: v7x
topology: tpu7x:2x2x1
jax: 0.10.0
libtpu: 0.0.40
codegen_flags: <defaults>
</compile_context>

<pallas_src>
import functools

import jax
import jax.numpy as jnp
from jax.experimental import pallas as pl
from jax.experimental.pallas import tpu as pltpu

_LANE = 128
_TINY_BYTES = 1 << 20  # below this: one full-array VMEM block, no grid machinery


def _round_up(a, m):
    return -(-a // m) * m


def _make_kernel(compute_dtype):
    def kernel(x_ref, o_ref):
        # x * sigmoid(1.702 x) == x / (1 + exp(-1.702 x)).
        # exp goes to the EUP slot; VALU work per element is one mul, one add, one div.
        x = x_ref[...].astype(compute_dtype)
        y = x / (1.0 + jnp.exp(x * (-1.702)))
        o_ref[...] = y.astype(o_ref.dtype)

    return kernel


@functools.lru_cache(maxsize=None)
def _generation_config():
    """Returns (block_bytes, vmem_limit_bytes_or_None, tensorcores, f32_compute_only)."""
    try:
        kind = jax.devices()[0].device_kind.lower()
    except Exception:
        kind = ""
    if "v6" in kind:
        # v6e: ~1.4 TB/s HBM, 1 TC. 4 MiB blocks -> 4 x 4 MiB fits the 32 MiB scoped default.
        return 4 << 20, None, 1, False
    if "v5" in kind or "v4" in kind or "v3" in kind or "v2" in kind:
        # v5e & older: ~0.8 TB/s HBM, 16 MiB scoped-VMEM default, no bf16 VPU/EUP.
        # 2 MiB blocks: 4 x 2 MiB = 8 MiB, comfortably under the default limit.
        return 2 << 20, None, 1, True
    # v7x (or unknown/newer): ~3.2 TB/s HBM, 2 TensorCores, 64 MiB physical VMEM per TC.
    # 8 MiB blocks -> 2 arrays x 2 buffers x 8 MiB = 32 MiB, so raise the scoped limit.
    return 8 << 20, 40 << 20, 2, False


def geglu(x):
    """Elementwise GEGLU: x * sigmoid(1.702 * x). Accepts any shape / float dtype."""
    orig_shape = x.shape
    dtype = x.dtype
    itemsize = jnp.dtype(dtype).itemsize
    n = x.size

    block_bytes, vmem_limit, cores, f32_only = _generation_config()
    if dtype == jnp.bfloat16 and not f32_only:
        compute_dtype = jnp.bfloat16      # native bf16 math on v6e/v7x
    else:
        compute_dtype = jnp.float32       # f32 math for f32 inputs and on v5e/older
    kernel = _make_kernel(compute_dtype)

    # Minimal native tile is (sublane, 128); sub-32-bit dtypes pack along sublanes.
    sublane = 8 * max(1, 4 // itemsize)   # 8 for f32, 16 for bf16

    # Lane-dense 2D view: widest last dim (<= 2048) that divides n exactly, so the
    # reshape is a free bitcast and NO pad / slice HBM round-trips are needed.
    width = None
    for cand in (2048, 1024, 512, 256, 128):
        if n % cand == 0:
            width = cand
            break
    if width is None:
        # Truly ragged total length (rare): pad the flat view up to one lane.
        width = _LANE
        n_pad = _round_up(n, _LANE)
        x2d = jnp.pad(x.reshape(-1), (0, n_pad - n)).reshape(n_pad // width, width)
        padded = True
    else:
        x2d = x.reshape(n // width, width)
        padded = False
    rows = x2d.shape[0]

    if rows * width * itemsize <= _TINY_BYTES:
        # Tiny input: one full-array block resident in VMEM, no grid / pipeline.
        out2d = pl.pallas_call(
            kernel,
            out_shape=jax.ShapeDtypeStruct((rows, width), dtype),
            in_specs=[pl.BlockSpec(memory_space=pltpu.MemorySpace.VMEM)],
            out_specs=pl.BlockSpec(memory_space=pltpu.MemorySpace.VMEM),
        )(x2d)
    else:
        # Streaming path: ~block_bytes blocks on a "parallel" 1-D grid. The grid is
        # cdiv-based, so `rows` need NOT divide tile_rows: Pallas masks writes of the
        # ragged last block (safe — purely elementwise, no reduction over the block).
        max_tile_rows = max(
            sublane, (block_bytes // (width * itemsize)) // sublane * sublane
        )
        tile_rows = min(max_tile_rows, _round_up(rows, sublane))
        if cores >= 2:
            # Keep both TensorCores busy on mid-size inputs: aim for >= 2*cores steps.
            balanced = max(sublane, _round_up(pl.cdiv(rows, 2 * cores), sublane))
            tile_rows = min(tile_rows, balanced)
        grid = (pl.cdiv(rows, tile_rows),)

        cp = dict(dimension_semantics=("parallel",))
        if vmem_limit is not None:
            cp["vmem_limit_bytes"] = vmem_limit

        out2d = pl.pallas_call(
            kernel,
            out_shape=jax.ShapeDtypeStruct((rows, width), dtype),
            grid_spec=pltpu.PrefetchScalarGridSpec(
                num_scalar_prefetch=0,
                grid=grid,
                in_specs=[pl.BlockSpec((tile_rows, width), lambda i: (i, 0))],
                out_specs=pl.BlockSpec((tile_rows, width), lambda i: (i, 0)),
            ),
            compiler_params=pltpu.CompilerParams(**cp),
        )(x2d)

    if padded:
        return out2d.reshape(-1)[:n].reshape(orig_shape)
    return out2d.reshape(orig_shape)


if __name__ == "__main__":
    key = jax.random.PRNGKey(0)

    # Small NCHW input consistent with the module's usage: (2, 4, 16, 16) — tiny path.
    x = jax.random.normal(key, (2, 4, 16, 16), dtype=jnp.float32)
    out = jax.block_until_ready(geglu(x))
    ref = x * jax.nn.sigmoid(1.702 * x)
    assert out.shape == x.shape
    assert jnp.allclose(out, ref, atol=1e-6, rtol=1e-5)

    # Larger input to exercise the tiled / pipelined (grid) path.
    x_big = jax.random.normal(jax.random.PRNGKey(1), (8, 16, 128, 128), dtype=jnp.float32)
    out_big = jax.block_until_ready(geglu(x_big))
    ref_big = x_big * jax.nn.sigmoid(1.702 * x_big)
    assert jnp.allclose(out_big, ref_big, atol=1e-6, rtol=1e-5)

    # bf16 input: native bf16 compute on v6e/v7x, f32 upcast on v5e/older.
    x_bf = jax.random.normal(jax.random.PRNGKey(2), (4, 8, 64, 64), dtype=jnp.bfloat16)
    out_bf = jax.block_until_ready(geglu(x_bf))
    xf = x_bf.astype(jnp.float32)
    ref_bf = xf * jax.nn.sigmoid(1.702 * xf)
    assert jnp.allclose(out_bf.astype(jnp.float32), ref_bf, atol=5e-2, rtol=5e-2)

    print("KERNEL_OK")
</pallas_src>

<mosaic_0001>
module attributes {stable_mosaic.version = 11 : i64} {
  func.func @kernel(%arg0: memref<1x2048xf32, #tpu.memory_space<vmem>>, %arg1: memref<1x2048xf32, #tpu.memory_space<vmem>>) attributes {dimension_semantics = [], scalar_prefetch = 0 : i64, scratch_operands = 0 : i64, tpu.core_type = #tpu.core_type<tc>} {
    %c0 = arith.constant 0 : index
    %c0_0 = arith.constant 0 : index
    %0 = vector.load %arg0[%c0, %c0_0] : memref<1x2048xf32, #tpu.memory_space<vmem>>, vector<1x2048xf32>
    %cst = arith.constant -1.702000e+00 : f32
    %1 = vector.broadcast %cst : f32 to vector<1x2048xf32>
    %2 = arith.mulf %0, %1 : vector<1x2048xf32>
    %3 = math.exp %2 : vector<1x2048xf32>
    %cst_1 = arith.constant 1.000000e+00 : f32
    %4 = vector.broadcast %cst_1 : f32 to vector<1x2048xf32>
    %5 = arith.addf %4, %3 : vector<1x2048xf32>
    %6 = arith.divf %0, %5 : vector<1x2048xf32>
    %c0_2 = arith.constant 0 : index
    %c0_3 = arith.constant 0 : index
    %7 = vector.load %arg1[%c0_2, %c0_3] : memref<1x2048xf32, #tpu.memory_space<vmem>>, vector<1x2048xf32>
    tpu.vector_store %arg1[%c0_2, %c0_3], %6 {strides = array<i32>} : memref<1x2048xf32, #tpu.memory_space<vmem>>, vector<1x2048xf32>,
    return
  }
}

</mosaic_0001>

<llo_original>
// kernel: tpu_custom_call.1
$region0: #{tpu_custom_call.1}
  #allocation0 [shape = 'u32[]', space=smem, size = 0x4, offset = 0x4, fixed_abs, tag = 'smem constant byte address 0x4 - core index']
  #allocation1 [shape = 'u32[144,128]{1,0:T(1,128)}', space=vmem, size = 0x12000, scoped, tag = 'internal scratch']
  %s0 = inlined_call_operand.hbm [shape: f32[1,2048], index: 0, kind: input, shape index: {}]
  %s1 = inlined_call_operand.hbm [shape: f32[1,2048], index: 1, kind: output, shape index: {}]
  %s2 = sld [smem:[#allocation0]]
  $region18: #{tpu_custom_call.1} parent=0
    _
  %s4 = ssub.s32 1, %s2
  %s5 = scalar_select 0, %s4, %s2
  $region1: #{tpu_custom_call.1} parent=0
    #allocation2 [shape = 'u8[8192]{0}', space=vmem, size = 0x2000, scoped, tag = 'input window, operand 0, single buffered']
    #allocation3 [shape = 's32[1]{0}', space=sflag, size = 0x4, scoped, tag = 'scoped memory for tpu_custom_call.1']
    #allocation4 [shape = 's32[1]{0}', space=sflag, size = 0x4, scoped, tag = 'scoped memory for tpu_custom_call.1']
    #allocation5 [shape = 'u8[8192]{0}', space=vmem, size = 0x2000, scoped, tag = 'output window, operand 0, single buffered']
    %6 = vsyncpa [#allocation3], 0
    %7 = vsyncpa [#allocation4], 0
    // Predicated region
    $region2: #{tpu_custom_call.1} parent=1 // pred_check
      _
    $region3: #{tpu_custom_call.1} parent=1 // pred_check_branch
      %9 = sbr.rel (0) target = $region5
    $region4: #{tpu_custom_call.1} parent=1 // pred_region
      %s11 = ssub.s32 256, 256
      %12 = vsyncadd [#allocation3], %s11
      %s14 = sshll.u32 [#allocation2], 4
      %s15 = int_to_ptr.vmem [resolvable:$true] %s14
      %17 = dma.hbm_to_vmem [thread:$0]  %s0, 256, %s15, [#allocation3]
    $region5: #{tpu_custom_call.1} parent=1 // pred_fallthru
      _
    // Predicated region
    $region6: #{tpu_custom_call.1} parent=1 // pred_check
      _
    $region7: #{tpu_custom_call.1} parent=1 // pred_check_branch
      %19 = sbr.rel (0) target = $region9
    $region8: #{tpu_custom_call.1} parent=1 // pred_region
      %20 = dma.done [#allocation3], 256
    $region9: #{tpu_custom_call.1} parent=1 // pred_fallthru
      _
    %v21 = vld [vmem:[#allocation2] sm:$0xff]
    %v22 = vld [vmem:[#allocation2 + $0x8] sm:$0xff]
    %v23 = vmul.f32 %v21, -1.702
    %v24 = vmul.f32 %v22, -1.702
    %v25 = vmul.f32 %v23, 1.442695
    %v26 = vpow.pop %v25
    %v27 = vmul.f32 %v24, 1.442695
    %v28 = vpow.pop %v27
    %v29 = vadd.f32 %v26, 1.0
    %v30 = vadd.f32 %v28, 1.0
    %v31 = vrcp.pop %v29
    %v32 = vmul.f32 %v21, %v31
    %v33 = vrcp.pop %v30
    %v34 = vmul.f32 %v22, %v33
    %35 = vst [vmem:[#allocation5] sm:$0xff] %v32
    %36 = vst [vmem:[#allocation5 + $0x8] sm:$0xff] %v34
    // Predicated region
    $region10: #{tpu_custom_call.1} parent=1 // pred_check
      _
    $region11: #{tpu_custom_call.1} parent=1 // pred_check_branch
      %38 = sbr.rel (0) target = $region13
    $region12: #{tpu_custom_call.1} parent=1 // pred_region
      %s40 = ssub.s32 256, 256
      %41 = vsyncadd [#allocation4], %s40
      %s43 = sshll.u32 [#allocation5], 4
      %s44 = int_to_ptr.vmem [resolvable:$true] %s43
      %46 = dma.vmem_to_hbm [thread:$0]  %s44, 256, %s1, [#allocation4]
    $region13: #{tpu_custom_call.1} parent=1 // pred_fallthru
      _
    // Predicated region
    $region14: #{tpu_custom_call.1} parent=1 // pred_check
      _
    $region15: #{tpu_custom_call.1} parent=1 // pred_check_branch
      %48 = sbr.rel (0) target = $region17
    $region16: #{tpu_custom_call.1} parent=1 // pred_region
      %49 = dma.done [#allocation4], 256
    $region17: #{tpu_custom_call.1} parent=1 // pred_fallthru
      _
    %50 = vsyncpa [#allocation3], 1
    %51 = vsyncpa [#allocation4], 1

</llo_original>
